<compile_context>
chip_gen: v7x
topology: tpu7x:2x2x1
jax: 0.10.0
libtpu: 0.0.40
codegen_flags: <defaults>
</compile_context>

<pallas_src>
import numpy as np
import jax
import jax.numpy as jnp
from jax.experimental import pallas as pl
from jax.experimental.pallas import tpu as pltpu

_LANE = 128


def _round_up(x, m):
    return ((x + m - 1) // m) * m


def _cdiv(a, b):
    return (a + b - 1) // b


def _choose_group(m, n_rbf):
    """Pick G | m (G <= 128, G*n_rbf <= 2048) maximizing lane utilisation of the
    packed output row (G*n_rbf lanes).  G=1 when n_rbf is already lane-dense."""
    if m <= 1 or n_rbf % _LANE == 0:
        return 1
    best_g = 1
    best_score = n_rbf / _round_up(n_rbf, _LANE) + n_rbf * 1e-6
    for g in range(2, min(m, _LANE) + 1):
        if m % g:
            continue
        lanes = g * n_rbf
        if lanes > 2048:
            break
        score = lanes / _round_up(lanes, _LANE) + lanes * 1e-6
        if score > best_score:
            best_g, best_score = g, score
    return best_g


def _vmem_limit_bytes():
    cap = 64 * 1024 * 1024            # v7x per-core physical VMEM: safe floor
    try:
        queried = int(pltpu.get_tpu_info().vmem_capacity_bytes)
        if queried >= 32 * 1024 * 1024:
            cap = queried
    except Exception:
        pass
    return min(cap, 96 * 1024 * 1024)


def _make_kernel(group):
    def kernel(x_ref, e_ref, par_ref, o_ref):
        x = x_ref[...].astype(jnp.float32)            # (bm, G)
        if group == 1:
            xr = x                                     # (bm, 1): lane-broadcasts below
        else:
            # Replicate each input element n_rbf times along lanes with a 0/1
            # matmul on the (otherwise idle) MXU.  The f32 value is split into
            # three bf16 parts so the replication is exact regardless of MXU
            # matmul precision.
            xh = x.astype(jnp.bfloat16)
            r1 = x - xh.astype(jnp.float32)
            xm = r1.astype(jnp.bfloat16)
            xl = (r1 - xm.astype(jnp.float32)).astype(jnp.bfloat16)
            e = e_ref[...]                             # (G, G*n_rbf) bf16 0/1
            xr = (jnp.dot(xh, e, preferred_element_type=jnp.float32)
                  + jnp.dot(xm, e, preferred_element_type=jnp.float32)
                  + jnp.dot(xl, e, preferred_element_type=jnp.float32))
        off = par_ref[0:1, :]                          # (1, lanes)
        coeff = par_ref[1:2, :]                        # (1, lanes)
        diff = xr - off
        o_ref[...] = jnp.exp(coeff * diff * diff).astype(o_ref.dtype)
    return kernel


def gaussian_rbf(inputs, offsets, widths):
    """Pallas TPU implementation of GaussianRBF.forward.

    inputs:  arbitrary-shaped array of distances.
    offsets: (n_rbf,) Gaussian centers.
    widths:  (n_rbf,) Gaussian widths.
    Returns inputs.shape + (n_rbf,) in inputs.dtype.
    """
    orig_shape = inputs.shape
    n_rbf = int(offsets.shape[-1])
    out_dtype = inputs.dtype
    m = int(np.prod(orig_shape)) if orig_shape else 1
    if m == 0:
        return jnp.zeros(orig_shape + (n_rbf,), out_dtype)

    off32 = offsets.astype(jnp.float32).reshape(1, n_rbf)
    coeff32 = (-0.5 / jnp.square(widths.astype(jnp.float32))).reshape(1, n_rbf)

    group = _choose_group(m, n_rbf)                    # packing factor (divides m)
    lanes = group * n_rbf
    rows = m // group

    x = inputs.reshape(rows, group)                    # contiguous reshape: free
    # offsets / coeff replicated per packed group, merged into one operand.
    params = jnp.concatenate([jnp.tile(off32, (1, group)),
                              jnp.tile(coeff32, (1, group))], axis=0)
    # 0/1 replication matrix: E[j, j*n_rbf + k] = 1 (exact in bf16).
    e_mat = jnp.asarray(np.kron(np.eye(group, dtype=np.float32),
                                np.ones((1, n_rbf), np.float32)),
                        dtype=jnp.bfloat16)

    # ---- block sizing from the lane/sublane-padded VMEM footprint ----
    in_isz = np.dtype(x.dtype).itemsize
    out_isz = np.dtype(out_dtype).itemsize
    row_mult = {4: 8, 2: 16, 1: 32}.get(out_isz, 8)
    lanes_pad = _round_up(lanes, _LANE)
    g_pad = _round_up(group, _LANE)

    vmem_limit = _vmem_limit_bytes()
    budget = min(vmem_limit // 2, 48 * 1024 * 1024)
    # resident constants (E + params), double-buffered, padded
    const_bytes = 2 * (_round_up(group, 16) * lanes_pad * 2 + 8 * lanes_pad * 4)
    avail = max(budget - const_bytes, 1 << 20)
    per_row = (2 * lanes_pad * out_isz                 # double-buffered output block
               + 2 * g_pad * in_isz                    # double-buffered input block
               + 4 * lanes_pad * 4)                    # in-kernel f32 temporaries
    block_rows = max(row_mult, (avail // per_row) // row_mult * row_mult)
    # keep >= ~4 grid steps so both v7x TensorCores and the pipeline stay busy
    block_rows = min(block_rows,
                     _round_up(max(_cdiv(rows, 4), row_mult), row_mult))
    if block_rows >= rows:
        block_rows = rows                              # single full-extent block
    grid = (_cdiv(rows, block_rows),)                  # ragged last block is masked

    out = pl.pallas_call(
        _make_kernel(group),
        out_shape=jax.ShapeDtypeStruct((rows, lanes), out_dtype),
        grid_spec=pltpu.PrefetchScalarGridSpec(
            num_scalar_prefetch=0,
            grid=grid,
            in_specs=[
                pl.BlockSpec((block_rows, group), lambda i: (i, 0)),   # x
                pl.BlockSpec((group, lanes), lambda i: (0, 0)),        # E (resident)
                pl.BlockSpec((2, lanes), lambda i: (0, 0)),            # offsets/coeff
            ],
            out_specs=pl.BlockSpec((block_rows, lanes), lambda i: (i, 0)),
        ),
        compiler_params=pltpu.CompilerParams(
            dimension_semantics=("parallel",),
            vmem_limit_bytes=vmem_limit,
        ),
    )(x, e_mat, params)

    # (rows, G*n_rbf) -> (..., n_rbf): contiguous reshape, no copy, no slice.
    return out.reshape(orig_shape + (n_rbf,))


def make_gaussian_rbf_params(n_rbf, cutoff, start=0.0):
    """Mirror GaussianRBF.__init__: evenly spaced centers, uniform widths."""
    offsets = jnp.linspace(start, cutoff, n_rbf, dtype=jnp.float32)
    if n_rbf > 1:
        width = jnp.abs(offsets[1] - offsets[0])
    else:
        width = jnp.asarray(cutoff, dtype=jnp.float32)
    widths = width * jnp.ones_like(offsets)
    return offsets, widths


if __name__ == "__main__":
    def _ref(inputs, offsets, widths):
        coeff = -0.5 / jnp.square(widths)
        diff = inputs[..., None] - offsets
        return jnp.exp(coeff * diff * diff)

    # Case 1: n_rbf multiple of 128 (lane-dense output, exact broadcast path).
    n_rbf, cutoff = 128, 5.0
    offsets, widths = make_gaussian_rbf_params(n_rbf, cutoff)
    d = jax.random.uniform(jax.random.PRNGKey(0), (2, 16, 16),
                           dtype=jnp.float32, maxval=cutoff)
    y = jax.block_until_ready(gaussian_rbf(d, offsets, widths))
    assert y.shape == d.shape + (n_rbf,) and y.dtype == d.dtype
    np.testing.assert_allclose(np.asarray(y),
                               np.asarray(_ref(d, offsets, widths)),
                               rtol=1e-5, atol=1e-6)

    # Case 2: small n_rbf (20): packed lane-dense output path (G=35 here).
    n_rbf2, cutoff2 = 20, 8.0
    offsets2, widths2 = make_gaussian_rbf_params(n_rbf2, cutoff2)
    d2 = jax.random.uniform(jax.random.PRNGKey(1), (3, 7, 5),
                            dtype=jnp.float32, maxval=cutoff2)
    y2 = jax.block_until_ready(gaussian_rbf(d2, offsets2, widths2))
    assert y2.shape == d2.shape + (n_rbf2,)
    # bf16-split MXU replication is exact to ~1 ulp; amplified through the
    # quadratic exponent this stays well inside 5e-5 relative.
    np.testing.assert_allclose(np.asarray(y2),
                               np.asarray(_ref(d2, offsets2, widths2)),
                               rtol=5e-5, atol=1e-6)

    print("KERNEL_OK")
</pallas_src>

<mosaic_0001>
module attributes {stable_mosaic.version = 11 : i64} {
  func.func @kernel(%arg0: i32, %arg1: memref<128x1xf32, #tpu.memory_space<vmem>>, %arg2: memref<1x128xbf16, #tpu.memory_space<vmem>>, %arg3: memref<2x128xf32, #tpu.memory_space<vmem>>, %arg4: memref<128x128xf32, #tpu.memory_space<vmem>>) attributes {dimension_semantics = [#tpu.dimension_semantics<parallel>], iteration_bounds = array<i64: 4>, scalar_prefetch = 0 : i64, scratch_operands = 0 : i64, tpu.core_type = #tpu.core_type<tc>, window_params = [{transform_indices = @transform_0, window_bounds = array<i64: 128, 1>}, {pipeline_mode = #tpu.pipeline_mode<synchronous>, transform_indices = @transform_1, window_bounds = array<i64: 1, 128>}, {pipeline_mode = #tpu.pipeline_mode<synchronous>, transform_indices = @transform_2, window_bounds = array<i64: 2, 128>}, {transform_indices = @transform_3, window_bounds = array<i64: 128, 128>}]} {
    %c0 = arith.constant 0 : index
    %c0_0 = arith.constant 0 : index
    %0 = vector.load %arg1[%c0, %c0_0] : memref<128x1xf32, #tpu.memory_space<vmem>>, vector<128x1xf32>
    %c0_1 = arith.constant 0 : index
    %c0_2 = arith.constant 0 : index
    %1 = vector.load %arg3[%c0_1, %c0_2] : memref<2x128xf32, #tpu.memory_space<vmem>>, vector<1x128xf32>
    %c1 = arith.constant 1 : index
    %c0_3 = arith.constant 0 : index
    %2 = vector.load %arg3[%c1, %c0_3] : memref<2x128xf32, #tpu.memory_space<vmem>>, vector<1x128xf32>
    %3 = vector.broadcast %0 : vector<128x1xf32> to vector<128x128xf32>
    %4 = vector.broadcast %1 : vector<1x128xf32> to vector<128x128xf32>
    %5 = arith.subf %3, %4 : vector<128x128xf32>
    %6 = vector.broadcast %2 : vector<1x128xf32> to vector<128x128xf32>
    %7 = arith.mulf %6, %5 : vector<128x128xf32>
    %8 = arith.mulf %7, %5 : vector<128x128xf32>
    %9 = math.exp %8 : vector<128x128xf32>
    %c0_4 = arith.constant 0 : index
    %c0_5 = arith.constant 0 : index
    %10 = vector.load %arg4[%c0_4, %c0_5] : memref<128x128xf32, #tpu.memory_space<vmem>>, vector<128x128xf32>
    tpu.vector_store %arg4[%c0_4, %c0_5], %9 {strides = array<i32>} : memref<128x128xf32, #tpu.memory_space<vmem>>, vector<128x128xf32>,
    return
  }
  func.func @transform_0(%arg0: i32) -> (i32, i32) {
    %c0_i32 = arith.constant 0 : i32
    %c0_i32_0 = arith.constant 0 : i32
    return %arg0, %c0_i32 : i32, i32
  }
  func.func @transform_1(%arg0: i32) -> (i32, i32) {
    %c0_i32 = arith.constant 0 : i32
    %c0_i32_0 = arith.constant 0 : i32
    %c0_i32_1 = arith.constant 0 : i32
    return %c0_i32, %c0_i32_0 : i32, i32
  }
  func.func @transform_2(%arg0: i32) -> (i32, i32) {
    %c0_i32 = arith.constant 0 : i32
    %c0_i32_0 = arith.constant 0 : i32
    %c0_i32_1 = arith.constant 0 : i32
    return %c0_i32, %c0_i32_0 : i32, i32
  }
  func.func @transform_3(%arg0: i32) -> (i32, i32) {
    %c0_i32 = arith.constant 0 : i32
    %c0_i32_0 = arith.constant 0 : i32
    return %arg0, %c0_i32 : i32, i32
  }
}

</mosaic_0001>

<llo_original>
// kernel: tpu_custom_call.1
$region0: #{tpu_custom_call.1}
  #allocation0 [shape = 'u32[]', space=smem, size = 0x4, offset = 0x4, fixed_abs, tag = 'smem constant byte address 0x4 - core index']
  #allocation1 [shape = 'u32[144,128]{1,0:T(1,128)}', space=vmem, size = 0x12000, scoped, tag = 'internal scratch']
  %s0 = inlined_call_operand.hbm [shape: f32[512,1], index: 0, kind: input, shape index: {}]
  %s1 = inlined_call_operand.hbm [shape: bf16[1,128], index: 1, kind: input, shape index: {}]
  %s2 = inlined_call_operand.hbm [shape: f32[2,128], index: 2, kind: input, shape index: {}]
  %s3 = inlined_call_operand.hbm [shape: f32[512,128], index: 3, kind: output, shape index: {}]
  %s4 = sld [smem:[#allocation0]]
  $region57: #{tpu_custom_call.1} parent=0
    _
  %s6 = ssub.s32 1, %s4
  %s7 = scalar_select 0, %s6, %s4
  $region1: #{tpu_custom_call.1} parent=0
    #allocation2 [shape = 'u8[131072]{0}', space=vmem, size = 0x20000, scoped, tag = 'input window, operand 0']
    #allocation3 [shape = 's32[2]{0}', space=sflag, size = 0x8, scoped, tag = 'scoped memory for tpu_custom_call.1']
    #allocation4 [shape = 's32[2]{0}', space=sflag, size = 0x8, scoped, tag = 'scoped memory for tpu_custom_call.1']
    #allocation5 [shape = 'u8[512]{0}', space=vmem, size = 0x400, scoped, tag = 'input window, operand 1, single buffered']
    #allocation6 [shape = 's32[1]{0}', space=sflag, size = 0x4, scoped, tag = 'scoped memory for tpu_custom_call.1']
    #allocation7 [shape = 'u8[1024]{0}', space=vmem, size = 0x400, scoped, tag = 'input window, operand 2, single buffered']
    #allocation8 [shape = 'u8[131072]{0}', space=vmem, size = 0x20000, scoped, tag = 'output window, operand 0']
    %8 = vsyncpa [#allocation3], 0
    %s9 = scalar_lea.sflag [#allocation3], 1
    %10 = vsyncpa %s9, 0
    %11 = vsyncpa [#allocation6], 0
    %12 = vsyncpa [#allocation4], 0
    %s13 = scalar_lea.sflag [#allocation4], 1
    %14 = vsyncpa %s13, 0
    loop: start=0, step=1, limit=6
    $region2: #{tpu_custom_call.1} parent=1 // loop_pre_header
      _
    $region3: #{tpu_custom_call.1} parent=1 // loop_header
      %s16 = sphi 0, %s20
      %p17 = scmp.ge.s32.totalorder %s16, 6
      %s26 = sphi 0, %s28
      %s29 = sphi 0, %s26
      %s30 = sphi 0, %s29
      %s46 = sphi 0, %s30
      %s50 = sphi 0, %s50
      %s52 = sphi 0, %s50
      %s53 = sphi 0, %s52
      %s67 = sphi 0, %s53
      %s71 = sphi 0, %s71
      %s73 = sphi 0, %s71
      %s74 = sphi 0, %s73
      %s88 = sphi 0, %s74
      %s94 = sphi 0, %s96
      %s97 = sphi 0, %s94
      %s98 = sphi 0, %s97
      %s114 = sphi 0, %s98
    $region4: #{tpu_custom_call.1} parent=1 // loop_header_branch
      %19 = sbr.rel (%p17) target = $region8
    $region5: #{tpu_custom_call.1} parent=1 // loop_body
      %s21 = ssub.s32 %s16, 1
      %s22 = ssub.s32 %s16, 2
      %s23 = sadd.s32 %s16, 1
      %s24 = ssub.s32 %s16, %s23
      %p25 = scmp.eq.s32.totalorder %s24, 0
      %s27 = sadd.s32 %s26, 1
      %s28 = scalar_select %p25, %s26, %s27
      %p31 = pneg %p25
      %p32 = scmp.eq.s32.totalorder %s16, 3
      %p33 = por %p31, %p32
      %p34 = scmp.ne.s32.totalorder %s26, %s29
      %p35 = scmp.eq.s32.totalorder %s16, 0
      %p36 = por %p34, %p35
      %p37 = scmp.ne.s32.totalorder %s26, %s29
      %p38 = scmp.eq.s32.totalorder %s21, 3
      %p39 = por %p37, %p38
      %p40 = scmp.ne.s32.totalorder %s29, %s30
      %p41 = scmp.eq.s32.totalorder %s21, 0
      %p42 = por %p40, %p41
      %p43 = scmp.ne.s32.totalorder %s29, %s30
      %p44 = scmp.eq.s32.totalorder %s22, 3
      %p45 = por %p43, %p44
      %p47 = scmp.ne.s32.totalorder %s30, %s46
      %p48 = scmp.eq.s32.totalorder %s22, 0
      %p49 = por %p47, %p48
      %s51 = sadd.s32 %s50, 1
      %p54 = scmp.eq.s32.totalorder %s16, 3
      %p55 = scmp.ne.s32.totalorder %s50, %s52
      %p56 = scmp.eq.s32.totalorder %s16, 0
      %p57 = por %p55, %p56
      %p58 = scmp.ne.s32.totalorder %s50, %s52
      %p59 = scmp.eq.s32.totalorder %s21, 3
      %p60 = por %p58, %p59
      %p61 = scmp.ne.s32.totalorder %s52, %s53
      %p62 = scmp.eq.s32.totalorder %s21, 0
      %p63 = por %p61, %p62
      %p64 = scmp.ne.s32.totalorder %s52, %s53
      %p65 = scmp.eq.s32.totalorder %s22, 3
      %p66 = por %p64, %p65
      %p68 = scmp.ne.s32.totalorder %s53, %s67
      %p69 = scmp.eq.s32.totalorder %s22, 0
      %p70 = por %p68, %p69
      %s72 = sadd.s32 %s71, 1
      %p75 = scmp.eq.s32.totalorder %s16, 3
      %p76 = scmp.ne.s32.totalorder %s71, %s73
      %p77 = scmp.eq.s32.totalorder %s16, 0
      %p78 = por %p76, %p77
      %p79 = scmp.ne.s32.totalorder %s71, %s73
      %p80 = scmp.eq.s32.totalorder %s21, 3
      %p81 = por %p79, %p80
      %p82 = scmp.ne.s32.totalorder %s73, %s74
      %p83 = scmp.eq.s32.totalorder %s21, 0
      %p84 = por %p82, %p83
      %p85 = scmp.ne.s32.totalorder %s73, %s74
      %p86 = scmp.eq.s32.totalorder %s22, 3
      %p87 = por %p85, %p86
      %p89 = scmp.ne.s32.totalorder %s74, %s88
      %p90 = scmp.eq.s32.totalorder %s22, 0
      %p91 = por %p89, %p90
      %s92 = ssub.s32 %s16, %s23
      %p93 = scmp.eq.s32.totalorder %s92, 0
      %s95 = sadd.s32 %s94, 1
      %s96 = scalar_select %p93, %s94, %s95
      %p99 = pneg %p93
      %p100 = scmp.eq.s32.totalorder %s16, 3
      %p101 = por %p99, %p100
      %p102 = scmp.ne.s32.totalorder %s94, %s97
      %p103 = scmp.eq.s32.totalorder %s16, 0
      %p104 = por %p102, %p103
      %p105 = scmp.ne.s32.totalorder %s94, %s97
      %p106 = scmp.eq.s32.totalorder %s21, 3
      %p107 = por %p105, %p106
      %p108 = scmp.ne.s32.totalorder %s97, %s98
      %p109 = scmp.eq.s32.totalorder %s21, 0
      %p110 = por %p108, %p109
      %p111 = scmp.ne.s32.totalorder %s97, %s98
      %p112 = scmp.eq.s32.totalorder %s22, 3
      %p113 = por %p111, %p112
      %p115 = scmp.ne.s32.totalorder %s98, %s114
      %p116 = scmp.eq.s32.totalorder %s22, 0
      %p117 = por %p115, %p116
      %p118 = scmp.le.s32.totalorder 1, %s16
      %p119 = scmp.lt.s32.totalorder %s16, 5
      %p120 = pnand %p118, %p119
      %p121 = pneg %p120
      // Predicated region
      $region9: #{tpu_custom_call.1} parent=5 // pred_check
        _
      $region10: #{tpu_custom_call.1} parent=5 // pred_check_branch
        %123 = sbr.rel (%p120) target = $region12
      $region11: #{tpu_custom_call.1} parent=5 // pred_region
        %s124 = ssub.s32 %s16, 1
        // Predicated region
        $region13: #{tpu_custom_call.1} parent=11 // pred_check
          %p125 = pneg %p63
        $region14: #{tpu_custom_call.1} parent=11 // pred_check_branch
          %127 = sbr.rel (%p125) target = $region16
        $region15: #{tpu_custom_call.1} parent=11 // pred_region
          %s129 = ssub.s32 16, 16
          %130 = vsyncadd [#allocation6], %s129
          %s132 = sshll.u32 [#allocation5], 4
          %s133 = int_to_ptr.vmem [resolvable:$true] %s132
          %135 = dma.hbm_to_vmem [thread:$0]  %s1, 16, %s133, [#allocation6]
        $region16: #{tpu_custom_call.1} parent=11 // pred_fallthru
          _
        // Predicated region
        $region17: #{tpu_custom_call.1} parent=11 // pred_check
          %p136 = pneg %p84
        $region18: #{tpu_custom_call.1} parent=11 // pred_check_branch
          %138 = sbr.rel (%p136) target = $region20
        $region19: #{tpu_custom_call.1} parent=11 // pred_region
          %s140 = ssub.s32 32, 32
          %141 = vsyncadd [#allocation6], %s140
          %s143 = sshll.u32 [#allocation7], 4
          %s144 = int_to_ptr.vmem [resolvable:$true] %s143
          %146 = dma.hbm_to_vmem [thread:$0]  %s2, 32, %s144, [#allocation6]
        $region20: #{tpu_custom_call.1} parent=11 // pred_fallthru
          _
      $region12: #{tpu_custom_call.1} parent=5 // pred_fallthru
        _
      %p147 = scmp.lt.s32.totalorder %s16, 4
      // Predicated region
      $region21: #{tpu_custom_call.1} parent=5 // pred_check
        %p148 = pneg %p147
      $region22: #{tpu_custom_call.1} parent=5 // pred_check_branch
        %150 = sbr.rel (%p148) target = $region24
      $region23: #{tpu_custom_call.1} parent=5 // pred_region
        // Predicated region
        $region25: #{tpu_custom_call.1} parent=23 // pred_check
          %p151 = pneg %p36
        $region26: #{tpu_custom_call.1} parent=23 // pred_check_branch
          %153 = sbr.rel (%p151) target = $region28
        $region27: #{tpu_custom_call.1} parent=23 // pred_region
          %s154 = sand.u32 %s26, 1
          %s155 = scalar_lea.sflag [#allocation3], %s154
          %s156 = sand.u32 %s26, 1
          %s157 = smul.addr %s156, 128
          %s158 = scalar_lea.vmem [#allocation2], %s157
          %s159 = smul.u32 16, %s16
          %s161 = ssub.s32 2048, 2048
          %162 = vsyncadd %s155, %s161
          %s163 = smul.addr %s159, 128
          %s164 = scalar_lea.hbm %s0, %s163
          %s165 = sshll.u32 %s158, 4
          %s166 = int_to_ptr.vmem [resolvable:$true] %s165
          %171 = dma.hbm_to_vmem [thread:$0]  %s164, 2048, %s166, %s155, 128, 128, 8
        $region28: #{tpu_custom_call.1} parent=23 // pred_fallthru
          _
      $region24: #{tpu_custom_call.1} parent=5 // pred_fallthru
        _
      %p172 = scmp.le.s32.totalorder 1, %s16
      %p173 = scmp.lt.s32.totalorder %s16, 5
      %p174 = pnand %p172, %p173
      %p175 = pneg %p174
      // Predicated region
      $region29: #{tpu_custom_call.1} parent=5 // pred_check
        _
      $region30: #{tpu_custom_call.1} parent=5 // pred_check_branch
        %177 = sbr.rel (%p174) target = $region32
      $region31: #{tpu_custom_call.1} parent=5 // pred_region
        %s178 = ssub.s32 %s16, 1
        %s179 = sand.u32 %s29, 1
        %s180 = scalar_lea.sflag [#allocation3], %s179
        %s181 = sand.u32 %s29, 1
        %s182 = smul.addr %s181, 128
        %s183 = scalar_lea.vmem [#allocation2], %s182
        // Predicated region
        $region33: #{tpu_custom_call.1} parent=31 // pred_check
          %p184 = pneg %p42
        $region34: #{tpu_custom_call.1} parent=31 // pred_check_branch
          %186 = sbr.rel (%p184) target = $region36
        $region35: #{tpu_custom_call.1} parent=31 // pred_region
          %187 = dma.done %s180, 2048
        $region36: #{tpu_custom_call.1} parent=31 // pred_fallthru
          _
        // Predicated region
        $region37: #{tpu_custom_call.1} parent=31 // pred_check
          %p188 = pneg %p63
        $region38: #{tpu_custom_call.1} parent=31 // pred_check_branch
          %190 = sbr.rel (%p188) target = $region40
        $region39: #{tpu_custom_call.1} parent=31 // pred_region
          %191 = dma.done [#allocation6], 16
        $region40: #{tpu_custom_call.1} parent=31 // pred_fallthru
          _
        // Predicated region
        $region41: #{tpu_custom_call.1} parent=31 // pred_check
          %p192 = pneg %p84
        $region42: #{tpu_custom_call.1} parent=31 // pred_check_branch
          %194 = sbr.rel (%p192) target = $region44
        $region43: #{tpu_custom_call.1} parent=31 // pred_region
          %195 = dma.done [#allocation6], 32
        $region44: #{tpu_custom_call.1} parent=31 // pred_fallthru
          _
        %s196 = sand.u32 %s29, 1
        %s197 = scalar_lea.sflag [#allocation3], %s196
        %s198 = sand.u32 %s29, 1
        %s199 = smul.addr %s198, 128
        %s200 = scalar_lea.vmem [#allocation2], %s199
        %p201 = pneg %p42
        %p202 = pneg %p39
        %p203 = pneg %p63
        %p204 = pneg %p60
        %p205 = pneg %p84
        %p206 = pneg %p81
        %p207 = pneg %p110
        %p208 = pneg %p107
        %s209 = sand.u32 %s97, 1
        %s210 = scalar_lea.sflag [#allocation4], %s209
        %s211 = sand.u32 %s97, 1
        %s212 = smul.addr %s211, 128
        %s213 = scalar_lea.vmem [#allocation8], %s212
        %s214 = smul.u32 16, %s21
        %s215 = smul.u32 16, %s21
        %v216 = vld [vmem:[%s183] sm:$0xff]
        %v217 = vld [vmem:[%s183 + $0x8] sm:$0xff]
        %v218 = vld [vmem:[%s183 + $0x10] sm:$0xff]
        %v219 = vld [vmem:[%s183 + $0x18] sm:$0xff]
        %v220 = vld [vmem:[%s183 + $0x20] sm:$0xff]
        %v221 = vld [vmem:[%s183 + $0x28] sm:$0xff]
        %v222 = vld [vmem:[%s183 + $0x30] sm:$0xff]
        %v223 = vld [vmem:[%s183 + $0x38] sm:$0xff]
        %v224 = vld [vmem:[%s183 + $0x40] sm:$0xff]
        %v225 = vld [vmem:[%s183 + $0x48] sm:$0xff]
        %v226 = vld [vmem:[%s183 + $0x50] sm:$0xff]
        %v227 = vld [vmem:[%s183 + $0x58] sm:$0xff]
        %v228 = vld [vmem:[%s183 + $0x60] sm:$0xff]
        %v229 = vld [vmem:[%s183 + $0x68] sm:$0xff]
        %v230 = vld [vmem:[%s183 + $0x70] sm:$0xff]
        %v231 = vld [vmem:[%s183 + $0x78] sm:$0xff]
        %v232 = vld [vmem:[#allocation7] sm:$0x1]
        %v233 = vld [vmem:[#allocation7 + $0x1] sm:$0x1]
        %235 = vset.pattern.permute.xlu0 0
        %236 = vperm.xlu0 %235, %v216
        %v237 = vpop.permute.xlu0 %236
        %240 = vset.pattern.permute.xlu0 0
        %241 = vperm.xlu0 %240, %v217
        %v242 = vpop.permute.xlu0 %241
        %245 = vset.pattern.permute.xlu0 0
        %246 = vperm.xlu0 %245, %v218
        %v247 = vpop.permute.xlu0 %246
        %250 = vset.pattern.permute.xlu0 0
        %251 = vperm.xlu0 %250, %v219
        %v252 = vpop.permute.xlu0 %251
        %255 = vset.pattern.permute.xlu0 0
        %256 = vperm.xlu0 %255, %v220
        %v257 = vpop.permute.xlu0 %256
        %260 = vset.pattern.permute.xlu0 0
        %261 = vperm.xlu0 %260, %v221
        %v262 = vpop.permute.xlu0 %261
        %265 = vset.pattern.permute.xlu0 0
        %266 = vperm.xlu0 %265, %v222
        %v267 = vpop.permute.xlu0 %266
        %270 = vset.pattern.permute.xlu0 0
        %271 = vperm.xlu0 %270, %v223
        %v272 = vpop.permute.xlu0 %271
        %275 = vset.pattern.permute.xlu0 0
        %276 = vperm.xlu0 %275, %v224
        %v277 = vpop.permute.xlu0 %276
        %280 = vset.pattern.permute.xlu0 0
        %281 = vperm.xlu0 %280, %v225
        %v282 = vpop.permute.xlu0 %281
        %285 = vset.pattern.permute.xlu0 0
        %286 = vperm.xlu0 %285, %v226
        %v287 = vpop.permute.xlu0 %286
        %290 = vset.pattern.permute.xlu0 0
        %291 = vperm.xlu0 %290, %v227
        %v292 = vpop.permute.xlu0 %291
        %295 = vset.pattern.permute.xlu0 0
        %296 = vperm.xlu0 %295, %v228
        %v297 = vpop.permute.xlu0 %296
        %300 = vset.pattern.permute.xlu0 0
        %301 = vperm.xlu0 %300, %v229
        %v302 = vpop.permute.xlu0 %301
        %305 = vset.pattern.permute.xlu0 0
        %306 = vperm.xlu0 %305, %v230
        %v307 = vpop.permute.xlu0 %306
        %310 = vset.pattern.permute.xlu0 0
        %311 = vperm.xlu0 %310, %v231
        %v312 = vpop.permute.xlu0 %311
        %v314 = vlaneseq
        %v315 = vshrl.u32 %v314, 7
        %v316 = vsub.s32 0, %v315
        %v317 = vrot.slane %v232, %v316
        %v318 = vsub.f32 %v237, %v317
        %v319 = vsub.f32 %v242, %v317
        %v320 = vsub.f32 %v247, %v317
        %v321 = vsub.f32 %v252, %v317
        %v322 = vsub.f32 %v257, %v317
        %v323 = vsub.f32 %v262, %v317
        %v324 = vsub.f32 %v267, %v317
        %v325 = vsub.f32 %v272, %v317
        %v326 = vsub.f32 %v277, %v317
        %v327 = vsub.f32 %v282, %v317
        %v328 = vsub.f32 %v287, %v317
        %v329 = vsub.f32 %v292, %v317
        %v330 = vsub.f32 %v297, %v317
        %v331 = vsub.f32 %v302, %v317
        %v332 = vsub.f32 %v307, %v317
        %v333 = vsub.f32 %v312, %v317
        %v334 = vlaneseq
        %v335 = vshrl.u32 %v334, 7
        %v336 = vsub.s32 0, %v335
        %v337 = vrot.slane %v233, %v336
        %v338 = vmul.f32 %v337, %v318
        %v339 = vmul.f32 %v337, %v319
        %v340 = vmul.f32 %v337, %v320
        %v341 = vmul.f32 %v337, %v321
        %v342 = vmul.f32 %v337, %v322
        %v343 = vmul.f32 %v337, %v323
        %v344 = vmul.f32 %v337, %v324
        %v345 = vmul.f32 %v337, %v325
        %v346 = vmul.f32 %v337, %v326
        %v347 = vmul.f32 %v337, %v327
        %v348 = vmul.f32 %v337, %v328
        %v349 = vmul.f32 %v337, %v329
        %v350 = vmul.f32 %v337, %v330
        %v351 = vmul.f32 %v337, %v331
        %v352 = vmul.f32 %v337, %v332
        %v353 = vmul.f32 %v337, %v333
        %v354 = vmul.f32 %v338, %v318
        %v355 = vmul.f32 %v339, %v319
        %v356 = vmul.f32 %v340, %v320
        %v357 = vmul.f32 %v341, %v321
        %v358 = vmul.f32 %v342, %v322
        %v359 = vmul.f32 %v343, %v323
        %v360 = vmul.f32 %v344, %v324
        %v361 = vmul.f32 %v345, %v325
        %v362 = vmul.f32 %v346, %v326
        %v363 = vmul.f32 %v347, %v327
        %v364 = vmul.f32 %v348, %v328
        %v365 = vmul.f32 %v349, %v329
        %v366 = vmul.f32 %v350, %v330
        %v367 = vmul.f32 %v351, %v331
        %v368 = vmul.f32 %v352, %v332
        %v369 = vmul.f32 %v353, %v333
        %v370 = vmul.f32 %v354, 1.442695
        %v371 = vpow.pop %v370
        %v372 = vmul.f32 %v355, 1.442695
        %v373 = vpow.pop %v372
        %v374 = vmul.f32 %v356, 1.442695
        %v375 = vpow.pop %v374
        %v376 = vmul.f32 %v357, 1.442695
        %v377 = vpow.pop %v376
        %v378 = vmul.f32 %v358, 1.442695
        %v379 = vpow.pop %v378
        %v380 = vmul.f32 %v359, 1.442695
        %v381 = vpow.pop %v380
        %v382 = vmul.f32 %v360, 1.442695
        %v383 = vpow.pop %v382
        %v384 = vmul.f32 %v361, 1.442695
        %v385 = vpow.pop %v384
        %v386 = vmul.f32 %v362, 1.442695
        %v387 = vpow.pop %v386
        %v388 = vmul.f32 %v363, 1.442695
        %v389 = vpow.pop %v388
        %v390 = vmul.f32 %v364, 1.442695
        %v391 = vpow.pop %v390
        %v392 = vmul.f32 %v365, 1.442695
        %v393 = vpow.pop %v392
        %v394 = vmul.f32 %v366, 1.442695
        %v395 = vpow.pop %v394
        %v396 = vmul.f32 %v367, 1.442695
        %v397 = vpow.pop %v396
        %v398 = vmul.f32 %v368, 1.442695
        %v399 = vpow.pop %v398
        %v400 = vmul.f32 %v369, 1.442695
        %v401 = vpow.pop %v400
        %402 = vst [vmem:[%s213] sm:$0xff] %v371
        %403 = vst [vmem:[%s213 + $0x8] sm:$0xff] %v373
        %404 = vst [vmem:[%s213 + $0x10] sm:$0xff] %v375
        %405 = vst [vmem:[%s213 + $0x18] sm:$0xff] %v377
        %406 = vst [vmem:[%s213 + $0x20] sm:$0xff] %v379
        %407 = vst [vmem:[%s213 + $0x28] sm:$0xff] %v381
        %408 = vst [vmem:[%s213 + $0x30] sm:$0xff] %v383
        %409 = vst [vmem:[%s213 + $0x38] sm:$0xff] %v385
        %410 = vst [vmem:[%s213 + $0x40] sm:$0xff] %v387
        %411 = vst [vmem:[%s213 + $0x48] sm:$0xff] %v389
        %412 = vst [vmem:[%s213 + $0x50] sm:$0xff] %v391
        %413 = vst [vmem:[%s213 + $0x58] sm:$0xff] %v393
        %414 = vst [vmem:[%s213 + $0x60] sm:$0xff] %v395
        %415 = vst [vmem:[%s213 + $0x68] sm:$0xff] %v397
        %416 = vst [vmem:[%s213 + $0x70] sm:$0xff] %v399
        %417 = vst [vmem:[%s213 + $0x78] sm:$0xff] %v401
        %s418 = sand.u32 %s97, 1
        %s419 = scalar_lea.sflag [#allocation4], %s418
        %s420 = sand.u32 %s97, 1
        %s421 = smul.addr %s420, 128
        %s422 = scalar_lea.vmem [#allocation8], %s421
        // Predicated region
        $region45: #{tpu_custom_call.1} parent=31 // pred_check
          %p423 = pneg %p107
        $region46: #{tpu_custom_call.1} parent=31 // pred_check_branch
          %425 = sbr.rel (%p423) target = $region48
        $region47: #{tpu_custom_call.1} parent=31 // pred_region
          %s426 = smul.u32 16, %s21
          %s428 = ssub.s32 2048, 2048
          %429 = vsyncadd %s419, %s428
          %s430 = smul.addr %s426, 128
          %s431 = scalar_lea.hbm %s3, %s430
          %s432 = sshll.u32 %s422, 4
          %s433 = int_to_ptr.vmem [resolvable:$true] %s432
          %438 = dma.vmem_to_hbm [thread:$0]  %s433, 2048, %s431, %s419, 128, 128, 8
        $region48: #{tpu_custom_call.1} parent=31 // pred_fallthru
          _
      $region32: #{tpu_custom_call.1} parent=5 // pred_fallthru
        _
      %p439 = scmp.le.s32.totalorder 2, %s16
      // Predicated region
      $region49: #{tpu_custom_call.1} parent=5 // pred_check
        %p440 = pneg %p439
      $region50: #{tpu_custom_call.1} parent=5 // pred_check_branch
        %442 = sbr.rel (%p440) target = $region52
      $region51: #{tpu_custom_call.1} parent=5 // pred_region
        %s443 = ssub.s32 %s16, 2
        // Predicated region
        $region53: #{tpu_custom_call.1} parent=51 // pred_check
          %p444 = pneg %p113
        $region54: #{tpu_custom_call.1} parent=51 // pred_check_branch
          %446 = sbr.rel (%p444) target = $region56
        $region55: #{tpu_custom_call.1} parent=51 // pred_region
          %s447 = sand.u32 %s98, 1
          %s448 = scalar_lea.sflag [#allocation4], %s447
          %s449 = sand.u32 %s98, 1
          %s450 = smul.addr %s449, 128
          %s451 = scalar_lea.vmem [#allocation8], %s450
          %452 = dma.done %s448, 2048
        $region56: #{tpu_custom_call.1} parent=51 // pred_fallthru
          _
      $region52: #{tpu_custom_call.1} parent=5 // pred_fallthru
        _
    $region6: #{tpu_custom_call.1} parent=1 // loop_footer
      %s20 = sadd.s32 1, %s16
    $region7: #{tpu_custom_call.1} parent=1 // loop_footer_branch
      %15 = sbr.rel target = $region3
    $region8: #{tpu_custom_call.1} parent=1 // loop_exit
      _
    %453 = vsyncpa [#allocation3], 1
    %s454 = scalar_lea.sflag [#allocation3], 1
    %455 = vsyncpa %s454, 1
    %456 = vsyncpa [#allocation6], 1
    %457 = vsyncpa [#allocation4], 1
    %s458 = scalar_lea.sflag [#allocation4], 1
    %459 = vsyncpa %s458, 1

</llo_original>
